<compile_context>
chip_gen: v6e
topology: v6e:2x2x1
jax: 0.10.0
libtpu: 0.0.40
codegen_flags: <defaults>
</compile_context>

<pallas_src>
import jax
import jax.numpy as jnp
from jax.experimental import pallas as pl
from jax.experimental.pallas import tpu as pltpu


def _round_up(n: int, m: int) -> int:
    return ((n + m - 1) // m) * m


def _unique_net_kernel(x_ref, w1_ref, b1_ref, w2_ref, b2_ref, w3_ref, b3_ref,
                       o_ref):
    # fc = Sequential(ReLU, Linear(E, H1), ReLU, Linear(H1, H1//2), ReLU,
    #                 Linear(H1//2, H2))
    # ReLU / bias adds in f32; matmul operands in bf16, accumulate in f32.
    h = jnp.maximum(x_ref[...], 0.0)                                   # ReLU
    h = jnp.dot(h.astype(jnp.bfloat16), w1_ref[...],                   # Linear 1
                preferred_element_type=jnp.float32)
    h = h + b1_ref[...]
    h = jnp.maximum(h, 0.0)                                            # ReLU
    h = jnp.dot(h.astype(jnp.bfloat16), w2_ref[...],                   # Linear 2
                preferred_element_type=jnp.float32)
    h = h + b2_ref[...]
    h = jnp.maximum(h, 0.0)                                            # ReLU
    h = jnp.dot(h.astype(jnp.bfloat16), w3_ref[...],                   # Linear 3
                preferred_element_type=jnp.float32)
    h = h + b3_ref[...]
    o_ref[...] = h.astype(o_ref.dtype)


def prepare_params(params, compute_dtype=jnp.bfloat16):
    """One-time prep: transpose to (in, out), pad feature dims to 128 lanes,
    cast weights to bf16 for the MXU.  Do this at init, not per forward."""
    w1, b1 = params["w1"], params["b1"]   # (H1, E), (H1,)
    w2, b2 = params["w2"], params["b2"]   # (H1//2, H1), (H1//2,)
    w3, b3 = params["w3"], params["b3"]   # (H2, H1//2), (H2,)
    H1, E = w1.shape
    H1h = w2.shape[0]
    H2 = w3.shape[0]
    H1p, H1hp, H2p = _round_up(H1, 128), _round_up(H1h, 128), _round_up(H2, 128)

    w1t = jnp.zeros((E, H1p), compute_dtype).at[:, :H1].set(
        w1.T.astype(compute_dtype))
    w2t = jnp.zeros((H1p, H1hp), compute_dtype).at[:H1, :H1h].set(
        w2.T.astype(compute_dtype))
    w3t = jnp.zeros((H1hp, H2p), compute_dtype).at[:H1h, :H2].set(
        w3.T.astype(compute_dtype))
    b1r = jnp.zeros((1, H1p), jnp.float32).at[:, :H1].set(b1.astype(jnp.float32))
    b2r = jnp.zeros((1, H1hp), jnp.float32).at[:, :H1h].set(b2.astype(jnp.float32))
    b3r = jnp.zeros((1, H2p), jnp.float32).at[:, :H2].set(b3.astype(jnp.float32))

    return {
        "w1t": w1t, "b1r": b1r, "w2t": w2t, "b2r": b2r, "w3t": w3t, "b3r": b3r,
        "dims": (E, H1p, H1hp, H2p, H2),
    }


def unique_net_forward(x, prepared, *, batch_tile=None):
    """x: (B, E) float32.  prepared: output of prepare_params()."""
    B, E = x.shape
    Ep, H1p, H1hp, H2p, H2 = prepared["dims"]
    assert E == Ep, "embedding_dim mismatch with prepared params"

    # Batch tile: biggest tile that keeps the pipeline double-buffered without
    # blowing VMEM; default 512 rows (sweep 256/512/1024 in production), never
    # the whole batch unless the batch is that small.
    if batch_tile is None:
        batch_tile = 512
    tb = min(_round_up(batch_tile, 8), _round_up(B, 8))
    n_tiles = pl.cdiv(B, tb)
    grid = (n_tiles,)

    # VMEM working set (bytes): x & out tiles are double-buffered f32; weights
    # (bf16) and biases (f32) are single-buffered (Buffered(1)).
    est_vmem = (2 * tb * E * 4 + 2 * tb * H2p * 4
                + (E * H1p + H1p * H1hp + H1hp * H2p) * 2
                + (H1p + H1hp + H2p) * 4)
    vmem_limit = int(min(max(32 * 2**20, 2 * est_vmem + 4 * 2**20), 100 * 2**20))

    cost = pl.CostEstimate(
        flops=2 * B * (E * H1p + H1p * H1hp + H1hp * H2p),
        transcendentals=0,
        bytes_accessed=(x.size * 4
                        + (E * H1p + H1p * H1hp + H1hp * H2p) * 2
                        + (H1p + H1hp + H2p) * 4
                        + B * H2p * 4),
    )

    # Weights / biases: constant index_map -> single-buffered (no wasted
    # second pipeline buffer).
    const = lambda shape: pl.BlockSpec(shape, lambda i: (0, 0),
                                       pipeline_mode=pl.Buffered(1))

    out_padded = pl.pallas_call(
        _unique_net_kernel,
        out_shape=jax.ShapeDtypeStruct((B, H2p), x.dtype),
        grid_spec=pltpu.PrefetchScalarGridSpec(
            num_scalar_prefetch=0,
            grid=grid,
            in_specs=[
                pl.BlockSpec((tb, E), lambda i: (i, 0)),   # x tile (pipelined)
                const((E, H1p)),                           # w1^T  (bf16)
                const((1, H1p)),                           # b1
                const((H1p, H1hp)),                        # w2^T  (bf16)
                const((1, H1hp)),                          # b2
                const((H1hp, H2p)),                        # w3^T  (bf16)
                const((1, H2p)),                           # b3
            ],
            out_specs=pl.BlockSpec((tb, H2p), lambda i: (i, 0)),
        ),
        compiler_params=pltpu.CompilerParams(
            dimension_semantics=("parallel",),
            vmem_limit_bytes=vmem_limit),
        cost_estimate=cost,
    )(x, prepared["w1t"], prepared["b1r"], prepared["w2t"], prepared["b2r"],
      prepared["w3t"], prepared["b3r"])

    # Drop the zero padding on the output feature dim.
    return out_padded[:, :H2]


def init_params(key, embedding_dim, hidden_1, hidden_2):
    """Deterministic synthetic parameter init (PyTorch nn.Linear layout)."""
    ks = jax.random.split(key, 6)

    def lin(kw, kb, out_f, in_f):
        bound = 1.0 / jnp.sqrt(in_f)
        w = jax.random.uniform(kw, (out_f, in_f), jnp.float32, -bound, bound)
        b = jax.random.uniform(kb, (out_f,), jnp.float32, -bound, bound)
        return w, b

    w1, b1 = lin(ks[0], ks[1], hidden_1, embedding_dim)
    w2, b2 = lin(ks[2], ks[3], hidden_1 // 2, hidden_1)
    w3, b3 = lin(ks[4], ks[5], hidden_2, hidden_1 // 2)
    return {"w1": w1, "b1": b1, "w2": w2, "b2": b2, "w3": w3, "b3": b3}


def reference_forward(x, p):
    h = jnp.maximum(x, 0.0)
    h = h @ p["w1"].T + p["b1"]
    h = jnp.maximum(h, 0.0)
    h = h @ p["w2"].T + p["b2"]
    h = jnp.maximum(h, 0.0)
    h = h @ p["w3"].T + p["b3"]
    return h


if __name__ == "__main__":
    embedding_dim, hidden_1, hidden_2 = 32, 64, 16
    batch = 8

    key = jax.random.PRNGKey(0)
    kx, kp = jax.random.split(key)
    x = jax.random.normal(kx, (batch, embedding_dim), jnp.float32)
    params = init_params(kp, embedding_dim, hidden_1, hidden_2)

    prepared = prepare_params(params)          # one-time weight prep (hoisted)
    out = unique_net_forward(x, prepared)
    out = jax.block_until_ready(out)

    ref = reference_forward(x, params)
    assert out.shape == (batch, hidden_2)
    # bf16 matmul operands (f32 accumulation) -> loosened tolerance vs f32 ref.
    assert jnp.allclose(out, ref, atol=5e-2, rtol=5e-2), "mismatch vs reference"

    print("KERNEL_OK")
</pallas_src>

<mosaic_0001>
module attributes {stable_mosaic.version = 11 : i64} {
  func.func @_unique_net_kernel(%arg0: i32, %arg1: memref<8x32xf32, #tpu.memory_space<vmem>>, %arg2: memref<32x128xbf16, #tpu.memory_space<vmem>>, %arg3: memref<1x128xf32, #tpu.memory_space<vmem>>, %arg4: memref<128x128xbf16, #tpu.memory_space<vmem>>, %arg5: memref<1x128xf32, #tpu.memory_space<vmem>>, %arg6: memref<128x128xbf16, #tpu.memory_space<vmem>>, %arg7: memref<1x128xf32, #tpu.memory_space<vmem>>, %arg8: memref<8x128xf32, #tpu.memory_space<vmem>>) attributes {dimension_semantics = [#tpu.dimension_semantics<parallel>], iteration_bounds = array<i64: 1>, scalar_prefetch = 0 : i64, scratch_operands = 0 : i64, tpu.core_type = #tpu.core_type<tc>, window_params = [{transform_indices = @transform_0, window_bounds = array<i64: 8, 32>}, {pipeline_mode = #tpu.pipeline_mode<synchronous>, transform_indices = @transform_1, window_bounds = array<i64: 32, 128>}, {pipeline_mode = #tpu.pipeline_mode<synchronous>, transform_indices = @transform_2, window_bounds = array<i64: 1, 128>}, {pipeline_mode = #tpu.pipeline_mode<synchronous>, transform_indices = @transform_3, window_bounds = array<i64: 128, 128>}, {pipeline_mode = #tpu.pipeline_mode<synchronous>, transform_indices = @transform_4, window_bounds = array<i64: 1, 128>}, {pipeline_mode = #tpu.pipeline_mode<synchronous>, transform_indices = @transform_5, window_bounds = array<i64: 128, 128>}, {pipeline_mode = #tpu.pipeline_mode<synchronous>, transform_indices = @transform_6, window_bounds = array<i64: 1, 128>}, {transform_indices = @transform_7, window_bounds = array<i64: 8, 128>}]} {
    %c0 = arith.constant 0 : index
    %c0_0 = arith.constant 0 : index
    %0 = vector.load %arg1[%c0, %c0_0] : memref<8x32xf32, #tpu.memory_space<vmem>>, vector<8x32xf32>
    %cst = arith.constant 0.000000e+00 : f32
    %1 = vector.broadcast %cst : f32 to vector<8x32xf32>
    %2 = arith.maximumf %0, %1 : vector<8x32xf32>
    %3 = arith.truncf %2 : vector<8x32xf32> to vector<8x32xbf16>
    %c0_1 = arith.constant 0 : index
    %c0_2 = arith.constant 0 : index
    %4 = vector.load %arg2[%c0_1, %c0_2] : memref<32x128xbf16, #tpu.memory_space<vmem>>, vector<32x128xbf16>
    %cst_3 = arith.constant dense<0.000000e+00> : vector<8x128xf32>
    %5 = tpu.matmul %3, %4, %cst_3 {dimension_numbers = #tpu.dot_dimension_numbers<[1], [0], [0], [1], [0, 0, 1, 1], [], []>} : vector<8x32xbf16>, vector<32x128xbf16>, vector<8x128xf32> -> vector<8x128xf32>
    %c0_4 = arith.constant 0 : index
    %c0_5 = arith.constant 0 : index
    %6 = vector.load %arg3[%c0_4, %c0_5] : memref<1x128xf32, #tpu.memory_space<vmem>>, vector<1x128xf32>
    %7 = vector.broadcast %6 : vector<1x128xf32> to vector<8x128xf32>
    %8 = arith.addf %5, %7 : vector<8x128xf32>
    %cst_6 = arith.constant 0.000000e+00 : f32
    %9 = vector.broadcast %cst_6 : f32 to vector<8x128xf32>
    %10 = arith.maximumf %8, %9 : vector<8x128xf32>
    %11 = arith.truncf %10 : vector<8x128xf32> to vector<8x128xbf16>
    %c0_7 = arith.constant 0 : index
    %c0_8 = arith.constant 0 : index
    %12 = vector.load %arg4[%c0_7, %c0_8] : memref<128x128xbf16, #tpu.memory_space<vmem>>, vector<128x128xbf16>
    %cst_9 = arith.constant dense<0.000000e+00> : vector<8x128xf32>
    %13 = tpu.matmul %11, %12, %cst_9 {dimension_numbers = #tpu.dot_dimension_numbers<[1], [0], [0], [1], [0, 0, 1, 1], [], []>} : vector<8x128xbf16>, vector<128x128xbf16>, vector<8x128xf32> -> vector<8x128xf32>
    %c0_10 = arith.constant 0 : index
    %c0_11 = arith.constant 0 : index
    %14 = vector.load %arg5[%c0_10, %c0_11] : memref<1x128xf32, #tpu.memory_space<vmem>>, vector<1x128xf32>
    %15 = vector.broadcast %14 : vector<1x128xf32> to vector<8x128xf32>
    %16 = arith.addf %13, %15 : vector<8x128xf32>
    %cst_12 = arith.constant 0.000000e+00 : f32
    %17 = vector.broadcast %cst_12 : f32 to vector<8x128xf32>
    %18 = arith.maximumf %16, %17 : vector<8x128xf32>
    %19 = arith.truncf %18 : vector<8x128xf32> to vector<8x128xbf16>
    %c0_13 = arith.constant 0 : index
    %c0_14 = arith.constant 0 : index
    %20 = vector.load %arg6[%c0_13, %c0_14] : memref<128x128xbf16, #tpu.memory_space<vmem>>, vector<128x128xbf16>
    %cst_15 = arith.constant dense<0.000000e+00> : vector<8x128xf32>
    %21 = tpu.matmul %19, %20, %cst_15 {dimension_numbers = #tpu.dot_dimension_numbers<[1], [0], [0], [1], [0, 0, 1, 1], [], []>} : vector<8x128xbf16>, vector<128x128xbf16>, vector<8x128xf32> -> vector<8x128xf32>
    %c0_16 = arith.constant 0 : index
    %c0_17 = arith.constant 0 : index
    %22 = vector.load %arg7[%c0_16, %c0_17] : memref<1x128xf32, #tpu.memory_space<vmem>>, vector<1x128xf32>
    %23 = vector.broadcast %22 : vector<1x128xf32> to vector<8x128xf32>
    %24 = arith.addf %21, %23 : vector<8x128xf32>
    %c0_18 = arith.constant 0 : index
    %c0_19 = arith.constant 0 : index
    %25 = vector.load %arg8[%c0_18, %c0_19] : memref<8x128xf32, #tpu.memory_space<vmem>>, vector<8x128xf32>
    tpu.vector_store %arg8[%c0_18, %c0_19], %24 {strides = array<i32>} : memref<8x128xf32, #tpu.memory_space<vmem>>, vector<8x128xf32>,
    return
  }
  func.func @transform_0(%arg0: i32) -> (i32, i32) {
    %c0_i32 = arith.constant 0 : i32
    %c0_i32_0 = arith.constant 0 : i32
    return %arg0, %c0_i32 : i32, i32
  }
  func.func @transform_1(%arg0: i32) -> (i32, i32) {
    %c0_i32 = arith.constant 0 : i32
    %c0_i32_0 = arith.constant 0 : i32
    %c0_i32_1 = arith.constant 0 : i32
    return %c0_i32, %c0_i32_0 : i32, i32
  }
  func.func @transform_2(%arg0: i32) -> (i32, i32) {
    %c0_i32 = arith.constant 0 : i32
    %c0_i32_0 = arith.constant 0 : i32
    %c0_i32_1 = arith.constant 0 : i32
    return %c0_i32, %c0_i32_0 : i32, i32
  }
  func.func @transform_3(%arg0: i32) -> (i32, i32) {
    %c0_i32 = arith.constant 0 : i32
    %c0_i32_0 = arith.constant 0 : i32
    %c0_i32_1 = arith.constant 0 : i32
    return %c0_i32, %c0_i32_0 : i32, i32
  }
  func.func @transform_4(%arg0: i32) -> (i32, i32) {
    %c0_i32 = arith.constant 0 : i32
    %c0_i32_0 = arith.constant 0 : i32
    %c0_i32_1 = arith.constant 0 : i32
    return %c0_i32, %c0_i32_0 : i32, i32
  }
  func.func @transform_5(%arg0: i32) -> (i32, i32) {
    %c0_i32 = arith.constant 0 : i32
    %c0_i32_0 = arith.constant 0 : i32
    %c0_i32_1 = arith.constant 0 : i32
    return %c0_i32, %c0_i32_0 : i32, i32
  }
  func.func @transform_6(%arg0: i32) -> (i32, i32) {
    %c0_i32 = arith.constant 0 : i32
    %c0_i32_0 = arith.constant 0 : i32
    %c0_i32_1 = arith.constant 0 : i32
    return %c0_i32, %c0_i32_0 : i32, i32
  }
  func.func @transform_7(%arg0: i32) -> (i32, i32) {
    %c0_i32 = arith.constant 0 : i32
    %c0_i32_0 = arith.constant 0 : i32
    return %arg0, %c0_i32 : i32, i32
  }
}

</mosaic_0001>

<llo_original>
// kernel: tpu_custom_call.1
$region0: #{tpu_custom_call.1}
  #allocation0 [shape = 'u32[]', space=smem, size = 0x4, offset = 0x4, fixed_abs, tag = 'smem constant byte address 0x4 - core index']
  #allocation1 [shape = 'u32[144,128]{1,0:T(1,128)}', space=vmem, size = 0x12000, scoped, tag = 'internal scratch']
  %s0 = inlined_call_operand.hbm [shape: f32[8,32], index: 0, kind: input, shape index: {}]
  %s1 = inlined_call_operand.hbm [shape: bf16[32,128], index: 1, kind: input, shape index: {}]
  %s2 = inlined_call_operand.vmem [shape: f32[1,128], index: 2, kind: input, shape index: {}]
  %s3 = inlined_call_operand.hbm [shape: bf16[128,128], index: 3, kind: input, shape index: {}]
  %s4 = inlined_call_operand.vmem [shape: f32[1,128], index: 4, kind: input, shape index: {}]
  %s5 = inlined_call_operand.hbm [shape: bf16[128,128], index: 5, kind: input, shape index: {}]
  %s6 = inlined_call_operand.vmem [shape: f32[1,128], index: 6, kind: input, shape index: {}]
  %s7 = inlined_call_operand.hbm [shape: f32[8,128], index: 7, kind: output, shape index: {}]
  %s8 = sld [smem:[#allocation0]]
  $region54: #{tpu_custom_call.1} parent=0
    _
  %s10 = ssub.s32 1, %s8
  %s11 = scalar_select 0, %s10, %s8
  $region1: #{tpu_custom_call.1} parent=0
    #allocation2 [shape = 'u8[4096]{0}', space=vmem, size = 0x1000, scoped, tag = 'input window, operand 0, single buffered']
    #allocation3 [shape = 's32[1]{0}', space=sflag, size = 0x4, scoped, tag = 'scoped memory for tpu_custom_call.1']
    #allocation4 [shape = 's32[1]{0}', space=sflag, size = 0x4, scoped, tag = 'scoped memory for tpu_custom_call.1']
    #allocation5 [shape = 'u8[8192]{0}', space=vmem, size = 0x2000, scoped, tag = 'input window, operand 1, single buffered']
    #allocation6 [shape = 's32[1]{0}', space=sflag, size = 0x4, scoped, tag = 'scoped memory for tpu_custom_call.1']
    #allocation7 [shape = 'u8[32768]{0}', space=vmem, size = 0x8000, scoped, tag = 'input window, operand 3, single buffered']
    #allocation8 [shape = 'u8[32768]{0}', space=vmem, size = 0x8000, scoped, tag = 'input window, operand 5, single buffered']
    #allocation9 [shape = 's32[1]{0}', space=sflag, size = 0x4, scoped, tag = 'scoped memory for tpu_custom_call.1']
    #allocation10 [shape = 'u8[4096]{0}', space=vmem, size = 0x1000, scoped, tag = 'output window, operand 0, single buffered']
    %12 = vsyncpa [#allocation3], 0
    %13 = vsyncpa [#allocation6], 0
    %14 = vsyncpa [#allocation9], 0
    %15 = vsyncpa [#allocation4], 0
    // Predicated region
    $region2: #{tpu_custom_call.1} parent=1 // pred_check
      _
    $region3: #{tpu_custom_call.1} parent=1 // pred_check_branch
      %17 = sbr.rel (0) target = $region5
    $region4: #{tpu_custom_call.1} parent=1 // pred_region
      %s19 = ssub.s32 128, 128
      %20 = vsyncadd [#allocation3], %s19
      %s22 = sshll.u32 [#allocation2], 4
      %s23 = int_to_ptr.vmem [resolvable:$true] %s22
      %25 = dma.hbm_to_vmem [thread:$0]  %s0, 128, %s23, [#allocation3]
    $region5: #{tpu_custom_call.1} parent=1 // pred_fallthru
      _
    // Predicated region
    $region6: #{tpu_custom_call.1} parent=1 // pred_check
      _
    $region7: #{tpu_custom_call.1} parent=1 // pred_check_branch
      %27 = sbr.rel (0) target = $region9
    $region8: #{tpu_custom_call.1} parent=1 // pred_region
      %s29 = ssub.s32 256, 256
      %30 = vsyncadd [#allocation6], %s29
      %s31 = sshll.u32 [#allocation5], 4
      %s32 = int_to_ptr.vmem [resolvable:$true] %s31
      %37 = dma.hbm_to_vmem [thread:$0]  %s1, 256, %s32, [#allocation6], 64, 64, 4
    $region9: #{tpu_custom_call.1} parent=1 // pred_fallthru
      _
    // Predicated region
    $region10: #{tpu_custom_call.1} parent=1 // pred_check
      _
    $region11: #{tpu_custom_call.1} parent=1 // pred_check_branch
      %39 = sbr.rel (0) target = $region13
    $region12: #{tpu_custom_call.1} parent=1 // pred_region
      _
    $region13: #{tpu_custom_call.1} parent=1 // pred_fallthru
      _
    // Predicated region
    $region14: #{tpu_custom_call.1} parent=1 // pred_check
      _
    $region15: #{tpu_custom_call.1} parent=1 // pred_check_branch
      %41 = sbr.rel (0) target = $region17
    $region16: #{tpu_custom_call.1} parent=1 // pred_region
      %s43 = ssub.s32 1024, 1024
      %44 = vsyncadd [#allocation6], %s43
      %s45 = sshll.u32 [#allocation7], 4
      %s46 = int_to_ptr.vmem [resolvable:$true] %s45
      %51 = dma.hbm_to_vmem [thread:$0]  %s3, 1024, %s46, [#allocation6], 64, 64, 4
    $region17: #{tpu_custom_call.1} parent=1 // pred_fallthru
      _
    // Predicated region
    $region18: #{tpu_custom_call.1} parent=1 // pred_check
      _
    $region19: #{tpu_custom_call.1} parent=1 // pred_check_branch
      %53 = sbr.rel (0) target = $region21
    $region20: #{tpu_custom_call.1} parent=1 // pred_region
      _
    $region21: #{tpu_custom_call.1} parent=1 // pred_fallthru
      _
    // Predicated region
    $region22: #{tpu_custom_call.1} parent=1 // pred_check
      _
    $region23: #{tpu_custom_call.1} parent=1 // pred_check_branch
      %55 = sbr.rel (0) target = $region25
    $region24: #{tpu_custom_call.1} parent=1 // pred_region
      %s57 = ssub.s32 1024, 1024
      %58 = vsyncadd [#allocation9], %s57
      %s59 = sshll.u32 [#allocation8], 4
      %s60 = int_to_ptr.vmem [resolvable:$true] %s59
      %65 = dma.hbm_to_vmem [thread:$0]  %s5, 1024, %s60, [#allocation9], 64, 64, 4
    $region25: #{tpu_custom_call.1} parent=1 // pred_fallthru
      _
    // Predicated region
    $region26: #{tpu_custom_call.1} parent=1 // pred_check
      _
    $region27: #{tpu_custom_call.1} parent=1 // pred_check_branch
      %67 = sbr.rel (0) target = $region29
    $region28: #{tpu_custom_call.1} parent=1 // pred_region
      _
    $region29: #{tpu_custom_call.1} parent=1 // pred_fallthru
      _
    // Predicated region
    $region30: #{tpu_custom_call.1} parent=1 // pred_check
      _
    $region31: #{tpu_custom_call.1} parent=1 // pred_check_branch
      %69 = sbr.rel (0) target = $region33
    $region32: #{tpu_custom_call.1} parent=1 // pred_region
      %70 = dma.done [#allocation3], 128
    $region33: #{tpu_custom_call.1} parent=1 // pred_fallthru
      _
    // Predicated region
    $region34: #{tpu_custom_call.1} parent=1 // pred_check
      _
    $region35: #{tpu_custom_call.1} parent=1 // pred_check_branch
      %72 = sbr.rel (0) target = $region37
    $region36: #{tpu_custom_call.1} parent=1 // pred_region
      %73 = dma.done [#allocation6], 256
    $region37: #{tpu_custom_call.1} parent=1 // pred_fallthru
      _
    // Predicated region
    $region38: #{tpu_custom_call.1} parent=1 // pred_check
      _
    $region39: #{tpu_custom_call.1} parent=1 // pred_check_branch
      %75 = sbr.rel (0) target = $region41
    $region40: #{tpu_custom_call.1} parent=1 // pred_region
      %76 = dma.done [#allocation6], 1024
    $region41: #{tpu_custom_call.1} parent=1 // pred_fallthru
      _
    // Predicated region
    $region42: #{tpu_custom_call.1} parent=1 // pred_check
      _
    $region43: #{tpu_custom_call.1} parent=1 // pred_check_branch
      %78 = sbr.rel (0) target = $region45
    $region44: #{tpu_custom_call.1} parent=1 // pred_region
      %79 = dma.done [#allocation9], 1024
    $region45: #{tpu_custom_call.1} parent=1 // pred_fallthru
      _
    %v81 = vld [vmem:[#allocation2] sm:$0xff]
    %v82 = vmax.f32 %v81, 0.0
    %v83 = vpack.c.bf16 %v82, %v82
    %v84 = vld [vmem:[#allocation5] sm:$0xf]
    %v85 = vld [vmem:[#allocation5 + $0x4] sm:$0xf]
    %v86 = vld [vmem:[#allocation5 + $0x8] sm:$0xf]
    %v87 = vld [vmem:[#allocation5 + $0xc] sm:$0xf]
    %v88 = vld [vmem:[%s2] sm:$0x1]
    %v90 = vlaneseq
    %v91 = vshrl.u32 %v90, 7
    %v92 = vsub.s32 0, %v91
    %v93 = vrot.slane %v88, %v92
    %v99 = vunpack.c.l.b16 %v84
    %v100 = vunpack.c.l.b16 %v85
    %v101 = vunpack.c.l.b16 %v86
    %v102 = vunpack.c.l.b16 %v87
    %v103 = vpack.c.b16 %v100, %v99
    %v104 = vpack.c.b16 %v102, %v101
    %vm107 = vcmask 261120
    %v109 = vsel %vm107, %v83, 0
    %111 = vmatprep.subr.bf16.mxu0 0
    %112 = vmatpush1.bf16.msra.mxu0 0
    %113 = vmatprep.subr.bf16.mxu0 0
    %114 = vmatpush1.bf16.msra.mxu0 0
    %115 = vmatprep.subr.bf16.mxu0 0
    %116 = vmatpush1.bf16.msra.mxu0 0
    %117 = vmatprep.subr.bf16.mxu0 0
    %118 = vmatpush1.bf16.msra.mxu0 0
    %119 = vmatprep.subr.bf16.mxu0 0
    %120 = vmatpush1.bf16.msra.mxu0 0
    %121 = vmatprep.subr.bf16.mxu0 0
    %122 = vmatpush1.bf16.msra.mxu0 0
    %123 = vmatprep.subr.bf16.mxu0 0
    %124 = vmatpush1.bf16.msra.mxu0 %v104
    %125 = vmatprep.subr.bf16.mxu0 0
    %126 = vmatpush1.bf16.msra.mxu0 %v103
    %127 = vmatprep.subr.bf16.mxu0 0
    %128 = vmatpush2.bf16.msra.mxu0 0
    %129 = vmatprep.subr.bf16.mxu0 0
    %130 = vmatpush2.bf16.msra.mxu0 0
    %131 = vmatprep.subr.bf16.mxu0 0
    %132 = vmatpush2.bf16.msra.mxu0 0
    %133 = vmatprep.subr.bf16.mxu0 0
    %134 = vmatpush2.bf16.msra.mxu0 0
    %135 = vmatprep.subr.bf16.mxu0 0
    %136 = vmatpush2.bf16.msra.mxu0 0
    %137 = vmatprep.subr.bf16.mxu0 0
    %138 = vmatpush2.bf16.msra.mxu0 0
    %139 = vmatprep.subr.bf16.mxu0 0
    %140 = vmatpush2.bf16.msra.mxu0 0
    %141 = vmatprep.subr.bf16.mxu0 0
    %142 = vmatpush2.bf16.msra.mxu0 0
    %143 = vmatprep.mubr.bf16.mxu0 0
    %144 = vmatmul.mubr.bf16.gmra.mxu0 %v109
    %v145 = vpop.f32.mrf.mxu0
    %v146 = vadd.f32 %v93, %v145
    %v147 = vpop.f32.mrf.mxu0
    %v148 = vpop.f32.mrf.mxu0
    %v149 = vpop.f32.mrf.mxu0
    %150 = vdwg.mxu0
    %v151 = vmax.f32 %v146, 0.0
    %v152 = vpack.c.bf16 %v151, %v151
    %v153 = vld [vmem:[#allocation7] sm:$0xf]
    %v154 = vld [vmem:[#allocation7 + $0x4] sm:$0xf]
    %v155 = vld [vmem:[#allocation7 + $0x8] sm:$0xf]
    %v156 = vld [vmem:[#allocation7 + $0xc] sm:$0xf]
    %v157 = vld [vmem:[#allocation7 + $0x10] sm:$0xf]
    %v158 = vld [vmem:[#allocation7 + $0x14] sm:$0xf]
    %v159 = vld [vmem:[#allocation7 + $0x18] sm:$0xf]
    %v160 = vld [vmem:[#allocation7 + $0x1c] sm:$0xf]
    %v161 = vld [vmem:[#allocation7 + $0x20] sm:$0xf]
    %v162 = vld [vmem:[#allocation7 + $0x24] sm:$0xf]
    %v163 = vld [vmem:[#allocation7 + $0x28] sm:$0xf]
    %v164 = vld [vmem:[#allocation7 + $0x2c] sm:$0xf]
    %v165 = vld [vmem:[#allocation7 + $0x30] sm:$0xf]
    %v166 = vld [vmem:[#allocation7 + $0x34] sm:$0xf]
    %v167 = vld [vmem:[#allocation7 + $0x38] sm:$0xf]
    %v168 = vld [vmem:[#allocation7 + $0x3c] sm:$0xf]
    %v169 = vld [vmem:[%s4] sm:$0x1]
    %v171 = vlaneseq
    %v172 = vshrl.u32 %v171, 7
    %v173 = vsub.s32 0, %v172
    %v174 = vrot.slane %v169, %v173
    %v192 = vunpack.c.l.b16 %v153
    %v193 = vunpack.c.l.b16 %v154
    %v194 = vunpack.c.l.b16 %v155
    %v195 = vunpack.c.l.b16 %v156
    %v196 = vunpack.c.l.b16 %v157
    %v197 = vunpack.c.l.b16 %v158
    %v198 = vunpack.c.l.b16 %v159
    %v199 = vunpack.c.l.b16 %v160
    %v200 = vunpack.c.l.b16 %v161
    %v201 = vunpack.c.l.b16 %v162
    %v202 = vunpack.c.l.b16 %v163
    %v203 = vunpack.c.l.b16 %v164
    %v204 = vunpack.c.l.b16 %v165
    %v205 = vunpack.c.l.b16 %v166
    %v206 = vunpack.c.l.b16 %v167
    %v207 = vunpack.c.l.b16 %v168
    %v208 = vpack.c.b16 %v193, %v192
    %v209 = vpack.c.b16 %v195, %v194
    %v210 = vpack.c.b16 %v197, %v196
    %v211 = vpack.c.b16 %v199, %v198
    %v212 = vpack.c.b16 %v201, %v200
    %v213 = vpack.c.b16 %v203, %v202
    %v214 = vpack.c.b16 %v205, %v204
    %v215 = vpack.c.b16 %v207, %v206
    %224 = vmatprep.subr.bf16.mxu0 0
    %225 = vmatpush1.bf16.msra.mxu0 %v215
    %226 = vmatprep.subr.bf16.mxu0 0
    %227 = vmatpush1.bf16.msra.mxu0 %v214
    %228 = vmatprep.subr.bf16.mxu0 0
    %229 = vmatpush1.bf16.msra.mxu0 %v213
    %230 = vmatprep.subr.bf16.mxu0 0
    %231 = vmatpush1.bf16.msra.mxu0 %v212
    %232 = vmatprep.subr.bf16.mxu0 0
    %233 = vmatpush1.bf16.msra.mxu0 %v211
    %234 = vmatprep.subr.bf16.mxu0 0
    %235 = vmatpush1.bf16.msra.mxu0 %v210
    %236 = vmatprep.subr.bf16.mxu0 0
    %237 = vmatpush1.bf16.msra.mxu0 %v209
    %238 = vmatprep.subr.bf16.mxu0 0
    %239 = vmatpush1.bf16.msra.mxu0 %v208
    %240 = vmatprep.subr.bf16.mxu0 0
    %241 = vmatpush2.bf16.msra.mxu0 0
    %242 = vmatprep.subr.bf16.mxu0 0
    %243 = vmatpush2.bf16.msra.mxu0 0
    %244 = vmatprep.subr.bf16.mxu0 0
    %245 = vmatpush2.bf16.msra.mxu0 0
    %246 = vmatprep.subr.bf16.mxu0 0
    %247 = vmatpush2.bf16.msra.mxu0 0
    %248 = vmatprep.subr.bf16.mxu0 0
    %249 = vmatpush2.bf16.msra.mxu0 0
    %250 = vmatprep.subr.bf16.mxu0 0
    %251 = vmatpush2.bf16.msra.mxu0 0
    %252 = vmatprep.subr.bf16.mxu0 0
    %253 = vmatpush2.bf16.msra.mxu0 0
    %254 = vmatprep.subr.bf16.mxu0 0
    %255 = vmatpush2.bf16.msra.mxu0 0
    %256 = vmatprep.mubr.bf16.mxu0 0
    %257 = vmatmul.mubr.bf16.gmra.mxu0 %v152
    %v258 = vpop.f32.mrf.mxu0
    %v259 = vadd.f32 %v174, %v258
    %v260 = vpop.f32.mrf.mxu0
    %v261 = vpop.f32.mrf.mxu0
    %v262 = vpop.f32.mrf.mxu0
    %263 = vdwg.mxu0
    %v264 = vmax.f32 %v259, 0.0
    %v265 = vpack.c.bf16 %v264, %v264
    %v266 = vld [vmem:[#allocation8] sm:$0xf]
    %v267 = vld [vmem:[#allocation8 + $0x4] sm:$0xf]
    %v268 = vld [vmem:[#allocation8 + $0x8] sm:$0xf]
    %v269 = vld [vmem:[#allocation8 + $0xc] sm:$0xf]
    %v270 = vld [vmem:[#allocation8 + $0x10] sm:$0xf]
    %v271 = vld [vmem:[#allocation8 + $0x14] sm:$0xf]
    %v272 = vld [vmem:[#allocation8 + $0x18] sm:$0xf]
    %v273 = vld [vmem:[#allocation8 + $0x1c] sm:$0xf]
    %v274 = vld [vmem:[#allocation8 + $0x20] sm:$0xf]
    %v275 = vld [vmem:[#allocation8 + $0x24] sm:$0xf]
    %v276 = vld [vmem:[#allocation8 + $0x28] sm:$0xf]
    %v277 = vld [vmem:[#allocation8 + $0x2c] sm:$0xf]
    %v278 = vld [vmem:[#allocation8 + $0x30] sm:$0xf]
    %v279 = vld [vmem:[#allocation8 + $0x34] sm:$0xf]
    %v280 = vld [vmem:[#allocation8 + $0x38] sm:$0xf]
    %v281 = vld [vmem:[#allocation8 + $0x3c] sm:$0xf]
    %v282 = vld [vmem:[%s6] sm:$0x1]
    %v284 = vlaneseq
    %v285 = vshrl.u32 %v284, 7
    %v286 = vsub.s32 0, %v285
    %v287 = vrot.slane %v282, %v286
    %v305 = vunpack.c.l.b16 %v266
    %v306 = vunpack.c.l.b16 %v267
    %v307 = vunpack.c.l.b16 %v268
    %v308 = vunpack.c.l.b16 %v269
    %v309 = vunpack.c.l.b16 %v270
    %v310 = vunpack.c.l.b16 %v271
    %v311 = vunpack.c.l.b16 %v272
    %v312 = vunpack.c.l.b16 %v273
    %v313 = vunpack.c.l.b16 %v274
    %v314 = vunpack.c.l.b16 %v275
    %v315 = vunpack.c.l.b16 %v276
    %v316 = vunpack.c.l.b16 %v277
    %v317 = vunpack.c.l.b16 %v278
    %v318 = vunpack.c.l.b16 %v279
    %v319 = vunpack.c.l.b16 %v280
    %v320 = vunpack.c.l.b16 %v281
    %v321 = vpack.c.b16 %v306, %v305
    %v322 = vpack.c.b16 %v308, %v307
    %v323 = vpack.c.b16 %v310, %v309
    %v324 = vpack.c.b16 %v312, %v311
    %v325 = vpack.c.b16 %v314, %v313
    %v326 = vpack.c.b16 %v316, %v315
    %v327 = vpack.c.b16 %v318, %v317
    %v328 = vpack.c.b16 %v320, %v319
    %337 = vmatprep.subr.bf16.mxu0 0
    %338 = vmatpush1.bf16.msra.mxu0 %v328
    %339 = vmatprep.subr.bf16.mxu0 0
    %340 = vmatpush1.bf16.msra.mxu0 %v327
    %341 = vmatprep.subr.bf16.mxu0 0
    %342 = vmatpush1.bf16.msra.mxu0 %v326
    %343 = vmatprep.subr.bf16.mxu0 0
    %344 = vmatpush1.bf16.msra.mxu0 %v325
    %345 = vmatprep.subr.bf16.mxu0 0
    %346 = vmatpush1.bf16.msra.mxu0 %v324
    %347 = vmatprep.subr.bf16.mxu0 0
    %348 = vmatpush1.bf16.msra.mxu0 %v323
    %349 = vmatprep.subr.bf16.mxu0 0
    %350 = vmatpush1.bf16.msra.mxu0 %v322
    %351 = vmatprep.subr.bf16.mxu0 0
    %352 = vmatpush1.bf16.msra.mxu0 %v321
    %353 = vmatprep.subr.bf16.mxu0 0
    %354 = vmatpush2.bf16.msra.mxu0 0
    %355 = vmatprep.subr.bf16.mxu0 0
    %356 = vmatpush2.bf16.msra.mxu0 0
    %357 = vmatprep.subr.bf16.mxu0 0
    %358 = vmatpush2.bf16.msra.mxu0 0
    %359 = vmatprep.subr.bf16.mxu0 0
    %360 = vmatpush2.bf16.msra.mxu0 0
    %361 = vmatprep.subr.bf16.mxu0 0
    %362 = vmatpush2.bf16.msra.mxu0 0
    %363 = vmatprep.subr.bf16.mxu0 0
    %364 = vmatpush2.bf16.msra.mxu0 0
    %365 = vmatprep.subr.bf16.mxu0 0
    %366 = vmatpush2.bf16.msra.mxu0 0
    %367 = vmatprep.subr.bf16.mxu0 0
    %368 = vmatpush2.bf16.msra.mxu0 0
    %369 = vmatprep.mubr.bf16.mxu0 0
    %370 = vmatmul.mubr.bf16.gmra.mxu0 %v265
    %v371 = vpop.f32.mrf.mxu0
    %v372 = vadd.f32 %v287, %v371
    %v373 = vpop.f32.mrf.mxu0
    %v374 = vpop.f32.mrf.mxu0
    %v375 = vpop.f32.mrf.mxu0
    %376 = vdwg.mxu0
    %377 = vst [vmem:[#allocation10] sm:$0xff] %v372
    // Predicated region
    $region46: #{tpu_custom_call.1} parent=1 // pred_check
      _
    $region47: #{tpu_custom_call.1} parent=1 // pred_check_branch
      %379 = sbr.rel (0) target = $region49
    $region48: #{tpu_custom_call.1} parent=1 // pred_region
      %s381 = ssub.s32 128, 128
      %382 = vsyncadd [#allocation4], %s381
      %s384 = sshll.u32 [#allocation10], 4
      %s385 = int_to_ptr.vmem [resolvable:$true] %s384
      %387 = dma.vmem_to_hbm [thread:$0]  %s385, 128, %s7, [#allocation4]
    $region49: #{tpu_custom_call.1} parent=1 // pred_fallthru
      _
    // Predicated region
    $region50: #{tpu_custom_call.1} parent=1 // pred_check
      _
    $region51: #{tpu_custom_call.1} parent=1 // pred_check_branch
      %389 = sbr.rel (0) target = $region53
    $region52: #{tpu_custom_call.1} parent=1 // pred_region
      %390 = dma.done [#allocation4], 128
    $region53: #{tpu_custom_call.1} parent=1 // pred_fallthru
      _
    %391 = vsyncpa [#allocation3], 1
    %392 = vsyncpa [#allocation6], 1
    %393 = vsyncpa [#allocation9], 1
    %394 = vsyncpa [#allocation4], 1

</llo_original>
